<compile_context>
chip_gen: v5e
topology: v5e:2x2
jax: 0.10.0
libtpu: 0.0.40
codegen_flags: <defaults>
</compile_context>

<pallas_src>
import functools
import math

import jax
import jax.numpy as jnp
from jax.experimental import pallas as pl
from jax.experimental.pallas import tpu as pltpu


def _round_up(v, m):
    return ((v + m - 1) // m) * m


def _choose_tile(dim_padded, max_tile, granule):
    """Largest multiple of `granule` <= max_tile that divides dim_padded."""
    t = max((min(max_tile, dim_padded) // granule) * granule, granule)
    while dim_padded % t != 0:
        t -= granule
    return t


def _vmem_budget_bytes():
    """~75% of physical VMEM: ~96 MiB on v5e/v6e (128 MiB), ~48 MiB on v7x (64 MiB)."""
    cap = 64 * 1024 * 1024
    try:
        cap = int(pltpu.get_tpu_info().vmem_capacity_bytes)
    except Exception:
        pass
    return int(cap * 0.75)


def _footprint_bytes(tm, tn, tk, r_pad, dsize, out_dsize, use_acc):
    # Double-buffered inputs + double-buffered output tile + optional scratch.
    f = 2 * (tm * tk + tk * tn + tm * r_pad + r_pad * tn) * dsize
    f += 2 * tn * 4                      # bias (f32)
    f += 2 * tm * tn * out_dsize         # output tile
    if use_acc:
        f += tm * tn * 4                 # acc scratch
    return f


def _select_tiles(m_pad, n_pad, k_pad, r_pad, dsize, out_dsize, use_acc, budget):
    sublane = 16 if dsize == 2 else 8
    tm = _choose_tile(m_pad, 512, sublane)
    tn = tk = 128
    for tn_cap, tk_cap in ((2048, 1024), (1536, 1024), (1024, 1024),
                           (1024, 512), (512, 512), (512, 256),
                           (256, 256), (128, 128)):
        tn = _choose_tile(n_pad, tn_cap, 128)
        tk = _choose_tile(k_pad, tk_cap, 128)
        if _footprint_bytes(tm, tn, tk, r_pad, dsize, out_dsize, use_acc) <= budget:
            break
    while (_footprint_bytes(tm, tn, tk, r_pad, dsize, out_dsize, use_acc) > budget
           and tm > sublane):
        tm = _choose_tile(m_pad, max(tm // 2, sublane), sublane)
    # Keep >= 2 blocks along a parallel axis so both v7x TensorCores get work.
    if m_pad // tm == 1 and n_pad // tn == 1 and n_pad >= 256:
        tn = _choose_tile(n_pad, max(n_pad // 2, 128), 128)
    return tm, tn, tk


# --------------------- Pre-pass: xa = (x @ A^T) * scaling ---------------------

def _xa_kernel(x_ref, at_ref, xa_ref, acc_ref, *, scaling):
    k = pl.program_id(1)

    @pl.when(k == 0)
    def _init():
        acc_ref[...] = jnp.zeros_like(acc_ref)

    acc_ref[...] += jnp.dot(x_ref[...], at_ref[...],
                            preferred_element_type=jnp.float32)

    @pl.when(k == pl.num_programs(1) - 1)
    def _fin():
        xa_ref[...] = (acc_ref[...] * scaling).astype(xa_ref.dtype)


# --------------------------- Main kernel variants -----------------------------

def _lora_kernel_out_resident(x_ref, wt_ref, b_ref, xa_ref, bt_ref, o_ref):
    """Output tile (f32) is the accumulator across the k axis (no scratch)."""
    k = pl.program_id(2)

    @pl.when(k == 0)
    def _init():
        o_ref[...] = jnp.zeros_like(o_ref)

    o_ref[...] += jnp.dot(x_ref[...], wt_ref[...],
                          preferred_element_type=jnp.float32)

    @pl.when(k == pl.num_programs(2) - 1)
    def _epilogue():
        o_ref[...] += jnp.dot(xa_ref[...], bt_ref[...],
                              preferred_element_type=jnp.float32) + b_ref[...]


def _lora_kernel_acc(x_ref, wt_ref, b_ref, xa_ref, bt_ref, o_ref, acc_ref):
    """f32 scratch accumulator; used when the output dtype is not f32."""
    k = pl.program_id(2)

    @pl.when(k == 0)
    def _init():
        acc_ref[...] = jnp.zeros_like(acc_ref)

    acc_ref[...] += jnp.dot(x_ref[...], wt_ref[...],
                            preferred_element_type=jnp.float32)

    @pl.when(k == pl.num_programs(2) - 1)
    def _epilogue():
        lora = jnp.dot(xa_ref[...], bt_ref[...],
                       preferred_element_type=jnp.float32)
        o_ref[...] = (acc_ref[...] + lora + b_ref[...]).astype(o_ref.dtype)


# ---------------------------------- Wrapper -----------------------------------

def lora_linear(x, w, bias, a, bmat, *, scaling, param_dtype=jnp.bfloat16):
    """Fused LoRA linear.

    x:(B,in)  w:(out,in)  bias:(out,)  a:(r,in)  bmat:(out,r) -> (B,out).
    param_dtype: dtype used to STREAM x / W / A / B through the MXU
    (accumulation is always f32). Defaults to bf16, which halves HBM bytes for
    this weight-streaming-bound kernel; pass jnp.float32 or None to keep exact
    f32 streaming.
    """
    out_dtype = x.dtype
    batch, in_features = x.shape
    out_features = w.shape[0]

    if a is None or bmat is None or a.shape[0] == 0:   # r == 0 -> plain linear
        a = jnp.zeros((1, in_features), x.dtype)
        bmat = jnp.zeros((out_features, 1), x.dtype)
        scaling = 0.0
    r = a.shape[0]

    compute_dtype = (jnp.dtype(param_dtype) if param_dtype is not None
                     else jnp.dtype(x.dtype))
    x = x.astype(compute_dtype)
    w = w.astype(compute_dtype)
    a = a.astype(compute_dtype)
    bmat = bmat.astype(compute_dtype)

    dsize = compute_dtype.itemsize
    out_dsize = jnp.dtype(out_dtype).itemsize
    sublane = 16 if dsize == 2 else 8

    m_pad = _round_up(batch, sublane)
    k_pad = _round_up(in_features, 128)
    n_pad = _round_up(out_features, 128)
    r_pad = _round_up(r, 128)

    use_out_resident = jnp.dtype(out_dtype) == jnp.float32
    budget = _vmem_budget_bytes()
    tm, tn, tk = _select_tiles(m_pad, n_pad, k_pad, r_pad, dsize, out_dsize,
                               not use_out_resident, budget)
    footprint = _footprint_bytes(tm, tn, tk, r_pad, dsize, out_dsize,
                                 not use_out_resident)
    vmem_limit = int(min(budget,
                         max(int(footprint * 1.25) + (4 << 20), 32 << 20)))

    # One-time layout plumbing: contracting-dim-first layouts, zero padded to
    # tile multiples (exact math; padded rows/cols sliced off at the end).
    x_p = jnp.pad(x, ((0, m_pad - batch), (0, k_pad - in_features)))
    wt = jnp.pad(w.T, ((0, k_pad - in_features), (0, n_pad - out_features)))
    at = jnp.pad(a.T, ((0, k_pad - in_features), (0, r_pad - r)))
    bt = jnp.pad(bmat.T, ((0, r_pad - r), (0, n_pad - out_features)))
    bias2d = jnp.pad(bias.astype(jnp.float32).reshape(1, out_features),
                     ((0, 0), (0, n_pad - out_features)))

    # ---- Pre-pass: xa = (x @ A^T) * scaling (tiny, O(B*K*r)) ----
    xa = pl.pallas_call(
        functools.partial(_xa_kernel, scaling=float(scaling)),
        out_shape=jax.ShapeDtypeStruct((m_pad, r_pad), compute_dtype),
        grid_spec=pltpu.PrefetchScalarGridSpec(
            num_scalar_prefetch=0,
            grid=(m_pad // tm, k_pad // tk),
            in_specs=[
                pl.BlockSpec((tm, tk), lambda i, k: (i, k)),      # x
                pl.BlockSpec((tk, r_pad), lambda i, k: (k, 0)),   # A^T
            ],
            out_specs=pl.BlockSpec((tm, r_pad), lambda i, k: (i, 0)),
            scratch_shapes=[pltpu.VMEM((tm, r_pad), jnp.float32)],
        ),
        compiler_params=pltpu.CompilerParams(
            dimension_semantics=("parallel", "arbitrary")),
    )(x_p, at)

    # ---- Main fused kernel: base matmul + bias + rank-r epilogue ----
    grid = (m_pad // tm, n_pad // tn, k_pad // tk)
    in_specs = [
        pl.BlockSpec((tm, tk), lambda i, j, k: (i, k)),      # x
        pl.BlockSpec((tk, tn), lambda i, j, k: (k, j)),      # W^T (hot stream)
        pl.BlockSpec((1, tn), lambda i, j, k: (0, j)),       # bias (f32)
        pl.BlockSpec((tm, r_pad), lambda i, j, k: (i, 0)),   # xa (i only)
        pl.BlockSpec((r_pad, tn), lambda i, j, k: (0, j)),   # B^T
    ]
    out_spec = pl.BlockSpec((tm, tn), lambda i, j, k: (i, j))

    if use_out_resident:
        kernel = _lora_kernel_out_resident
        scratch = []
    else:
        kernel = _lora_kernel_acc
        scratch = [pltpu.VMEM((tm, tn), jnp.float32)]

    out_p = pl.pallas_call(
        kernel,
        out_shape=jax.ShapeDtypeStruct((m_pad, n_pad), out_dtype),
        grid_spec=pltpu.PrefetchScalarGridSpec(
            num_scalar_prefetch=0,
            grid=grid,
            in_specs=in_specs,
            out_specs=out_spec,
            scratch_shapes=scratch,
        ),
        compiler_params=pltpu.CompilerParams(
            dimension_semantics=("parallel", "parallel", "arbitrary"),
            vmem_limit_bytes=vmem_limit,
        ),
    )(x_p, wt, bias2d, xa, bt)

    return out_p[:batch, :out_features]


def lora_linear_ref(x, w, bias, a, bmat, *, scaling):
    base = x @ w.T + bias
    return base + (x @ a.T @ bmat.T) * scaling


if __name__ == "__main__":
    # --- Module-consistent small shapes -------------------------------------
    in_features, out_features, r, alpha = 32, 32, 4, 1.0
    batch = 8
    scaling = alpha / r

    key = jax.random.PRNGKey(0)
    (kx, kw, kb, ka, kB,
     kx2, kw2, kb2, ka2, kB2) = jax.random.split(key, 10)

    # Deterministic init mirroring the PyTorch module:
    #   nn.Linear default: U(-1/sqrt(in), 1/sqrt(in)) for weight and bias.
    #   A: kaiming_uniform_(a=sqrt(5)) -> U(-1/sqrt(in), 1/sqrt(in)).
    #   B: zeros.
    bound = 1.0 / math.sqrt(in_features)
    W = jax.random.uniform(kw, (out_features, in_features), jnp.float32, -bound, bound)
    bvec = jax.random.uniform(kb, (out_features,), jnp.float32, -bound, bound)
    A = jax.random.uniform(ka, (r, in_features), jnp.float32, -bound, bound)
    Bmat0 = jnp.zeros((out_features, r), jnp.float32)          # module init
    Bmat = jax.random.uniform(kB, (out_features, r), jnp.float32, -bound, bound)
    x = jax.random.normal(kx, (batch, in_features), jnp.float32)

    # 1) Exact-f32 streaming, module init state (B == 0).
    out = lora_linear(x, W, bvec, A, Bmat0, scaling=scaling,
                      param_dtype=jnp.float32)
    jax.block_until_ready(out)
    ref = lora_linear_ref(x, W, bvec, A, Bmat0, scaling=scaling)
    assert jnp.allclose(out, ref, atol=1e-4, rtol=1e-4)

    # 2) Exact-f32 streaming, non-zero B (exercises the LoRA branch).
    out = lora_linear(x, W, bvec, A, Bmat, scaling=scaling,
                      param_dtype=jnp.float32)
    jax.block_until_ready(out)
    ref = lora_linear_ref(x, W, bvec, A, Bmat, scaling=scaling)
    assert jnp.allclose(out, ref, atol=1e-4, rtol=1e-4)

    # 3) Default bf16 streaming (f32 accumulation) on the small shapes.
    out_bf = lora_linear(x, W, bvec, A, Bmat, scaling=scaling)
    jax.block_until_ready(out_bf)
    assert jnp.allclose(out_bf, ref, atol=5e-2, rtol=5e-2)

    # 4) Multi-tile grid (multiple k reduction steps and j output tiles).
    in2, out2, rank2, batch2 = 2048, 640, 8, 16
    scaling2 = alpha / rank2
    bound2 = 1.0 / math.sqrt(in2)
    W2 = jax.random.uniform(kw2, (out2, in2), jnp.float32, -bound2, bound2)
    b2 = jax.random.uniform(kb2, (out2,), jnp.float32, -bound2, bound2)
    A2 = jax.random.uniform(ka2, (rank2, in2), jnp.float32, -bound2, bound2)
    B2 = jax.random.uniform(kB2, (out2, rank2), jnp.float32, -bound2, bound2)
    x2 = jax.random.normal(kx2, (batch2, in2), jnp.float32)

    out4 = lora_linear(x2, W2, b2, A2, B2, scaling=scaling2,
                       param_dtype=jnp.float32)
    jax.block_until_ready(out4)
    ref4 = lora_linear_ref(x2, W2, b2, A2, B2, scaling=scaling2)
    assert jnp.allclose(out4, ref4, atol=3e-4, rtol=3e-4)

    # 4b) Default bf16 weight/activation streaming on the larger shapes.
    out4b = lora_linear(x2, W2, b2, A2, B2, scaling=scaling2)
    jax.block_until_ready(out4b)
    assert jnp.allclose(out4b, ref4, atol=6e-2, rtol=6e-2)

    # 5) bf16 input/output dtype (exercises the scratch-accumulator variant).
    out5 = lora_linear(x2.astype(jnp.bfloat16), W2, b2, A2, B2, scaling=scaling2)
    jax.block_until_ready(out5)
    assert jnp.allclose(out5.astype(jnp.float32), ref4, atol=1e-1, rtol=1e-1)

    print("KERNEL_OK")
</pallas_src>

<mosaic_0001>
module attributes {stable_mosaic.version = 11 : i64} {
  func.func @_xa_kernel(%arg0: i32, %arg1: i32, %arg2: memref<8x128xf32, #tpu.memory_space<vmem>>, %arg3: memref<128x128xf32, #tpu.memory_space<vmem>>, %arg4: memref<8x128xf32, #tpu.memory_space<vmem>>, %arg5: memref<8x128xf32, #tpu.memory_space<vmem>>) attributes {dimension_semantics = [#tpu.dimension_semantics<parallel>, #tpu.dimension_semantics<arbitrary>], iteration_bounds = array<i64: 1, 1>, scalar_prefetch = 0 : i64, scratch_operands = 1 : i64, tpu.core_type = #tpu.core_type<tc>, window_params = [{transform_indices = @transform_0, window_bounds = array<i64: 8, 128>}, {transform_indices = @transform_1, window_bounds = array<i64: 128, 128>}, {transform_indices = @transform_2, window_bounds = array<i64: 8, 128>}]} {
    %c0_i32 = arith.constant 0 : i32
    %0 = arith.cmpi eq, %arg1, %c0_i32 : i32
    %1 = arith.extui %0 : i1 to i32
    %c0_i32_0 = arith.constant 0 : i32
    %2 = arith.cmpi ne, %1, %c0_i32_0 : i32
    scf.if %2 {
      %cst_10 = arith.constant 0.000000e+00 : f32
      %12 = vector.broadcast %cst_10 : f32 to vector<8x128xf32>
      %c0_11 = arith.constant 0 : index
      %c0_12 = arith.constant 0 : index
      %13 = vector.load %arg5[%c0_11, %c0_12] : memref<8x128xf32, #tpu.memory_space<vmem>>, vector<8x128xf32>
      tpu.vector_store %arg5[%c0_11, %c0_12], %12 {strides = array<i32>} : memref<8x128xf32, #tpu.memory_space<vmem>>, vector<8x128xf32>,
    } else {
    }
    %c0 = arith.constant 0 : index
    %c0_1 = arith.constant 0 : index
    %3 = vector.load %arg5[%c0, %c0_1] : memref<8x128xf32, #tpu.memory_space<vmem>>, vector<8x128xf32>
    %c0_2 = arith.constant 0 : index
    %c0_3 = arith.constant 0 : index
    %4 = vector.load %arg2[%c0_2, %c0_3] : memref<8x128xf32, #tpu.memory_space<vmem>>, vector<8x128xf32>
    %c0_4 = arith.constant 0 : index
    %c0_5 = arith.constant 0 : index
    %5 = vector.load %arg3[%c0_4, %c0_5] : memref<128x128xf32, #tpu.memory_space<vmem>>, vector<128x128xf32>
    %cst = arith.constant dense<0.000000e+00> : vector<8x128xf32>
    %6 = tpu.matmul %4, %5, %cst {dimension_numbers = #tpu.dot_dimension_numbers<[1], [0], [0], [1], [0, 0, 1, 1], [], []>} : vector<8x128xf32>, vector<128x128xf32>, vector<8x128xf32> -> vector<8x128xf32>
    %7 = arith.addf %3, %6 : vector<8x128xf32>
    %c0_6 = arith.constant 0 : index
    %c0_7 = arith.constant 0 : index
    %8 = vector.load %arg5[%c0_6, %c0_7] : memref<8x128xf32, #tpu.memory_space<vmem>>, vector<8x128xf32>
    tpu.vector_store %arg5[%c0_6, %c0_7], %7 {strides = array<i32>} : memref<8x128xf32, #tpu.memory_space<vmem>>, vector<8x128xf32>,
    %c0_i32_8 = arith.constant 0 : i32
    %9 = arith.cmpi eq, %arg1, %c0_i32_8 : i32
    %10 = arith.extui %9 : i1 to i32
    %c0_i32_9 = arith.constant 0 : i32
    %11 = arith.cmpi ne, %10, %c0_i32_9 : i32
    scf.if %11 {
      %c0_10 = arith.constant 0 : index
      %c0_11 = arith.constant 0 : index
      %12 = vector.load %arg5[%c0_10, %c0_11] : memref<8x128xf32, #tpu.memory_space<vmem>>, vector<8x128xf32>
      %cst_12 = arith.constant 2.500000e-01 : f32
      %13 = vector.broadcast %cst_12 : f32 to vector<8x128xf32>
      %14 = arith.mulf %12, %13 : vector<8x128xf32>
      %c0_13 = arith.constant 0 : index
      %c0_14 = arith.constant 0 : index
      %15 = vector.load %arg4[%c0_13, %c0_14] : memref<8x128xf32, #tpu.memory_space<vmem>>, vector<8x128xf32>
      tpu.vector_store %arg4[%c0_13, %c0_14], %14 {strides = array<i32>} : memref<8x128xf32, #tpu.memory_space<vmem>>, vector<8x128xf32>,
    } else {
    }
    return
  }
  func.func @transform_0(%arg0: i32, %arg1: i32) -> (i32, i32) {
    %c0_i32 = arith.constant 0 : i32
    return %arg0, %arg1 : i32, i32
  }
  func.func @transform_1(%arg0: i32, %arg1: i32) -> (i32, i32) {
    %c0_i32 = arith.constant 0 : i32
    %c0_i32_0 = arith.constant 0 : i32
    return %arg1, %c0_i32 : i32, i32
  }
  func.func @transform_2(%arg0: i32, %arg1: i32) -> (i32, i32) {
    %c0_i32 = arith.constant 0 : i32
    %c0_i32_0 = arith.constant 0 : i32
    return %arg0, %c0_i32 : i32, i32
  }
}

</mosaic_0001>

<llo_original>
// kernel: tpu_custom_call.1
$region0: #{tpu_custom_call.1}
  #allocation0 [shape = 'u32[]', space=smem, size = 0x4, offset = 0x4, fixed_abs, tag = 'smem constant byte address 0x4 - core index']
  #allocation1 [shape = 'u32[72,128]{1,0:T(1,128)}', space=vmem, size = 0x9000, scoped, tag = 'internal scratch']
  #allocation2 [shape = 'f32[8,128]{1,0:T(8,128)}', space=vmem, size = 0x1000, scoped, tag = 'scratch operand']
  %s0 = inlined_call_operand.hbm [shape: f32[8,128], index: 0, kind: input, shape index: {}]
  %s1 = inlined_call_operand.hbm [shape: f32[128,128], index: 1, kind: input, shape index: {}]
  %s2 = inlined_call_operand.hbm [shape: f32[8,128], index: 2, kind: output, shape index: {}]
  %s3 = sld [smem:[#allocation0]]
  $region34: #{tpu_custom_call.1} parent=0
    _
  %s5 = ssub.s32 1, %s3
  %s6 = scalar_select 0, %s5, %s3
  $region1: #{tpu_custom_call.1} parent=0
    #allocation3 [shape = 'u8[4096]{0}', space=vmem, size = 0x1000, scoped, tag = 'input window, operand 0, single buffered']
    #allocation4 [shape = 's32[1]{0}', space=sflag, size = 0x4, scoped, tag = 'scoped memory for tpu_custom_call.1']
    #allocation5 [shape = 's32[1]{0}', space=sflag, size = 0x4, scoped, tag = 'scoped memory for tpu_custom_call.1']
    #allocation6 [shape = 'u8[65536]{0}', space=vmem, size = 0x10000, scoped, tag = 'input window, operand 1, single buffered']
    #allocation7 [shape = 's32[1]{0}', space=sflag, size = 0x4, scoped, tag = 'scoped memory for tpu_custom_call.1']
    #allocation8 [shape = 'u8[4096]{0}', space=vmem, size = 0x1000, scoped, tag = 'output window, operand 0, single buffered']
    %7 = vsyncpa [#allocation4], 0
    %8 = vsyncpa [#allocation7], 0
    %9 = vsyncpa [#allocation5], 0
    // Predicated region
    $region2: #{tpu_custom_call.1} parent=1 // pred_check
      _
    $region3: #{tpu_custom_call.1} parent=1 // pred_check_branch
      %11 = sbr.rel (0) target = $region5
    $region4: #{tpu_custom_call.1} parent=1 // pred_region
      %13 = vsyncadd [#allocation4], 0
      %s15 = sshll.u32 %s0, 4
      %s16 = int_to_ptr.hbm [resolvable:$true] %s15
      %s17 = sshll.u32 [#allocation3], 4
      %s18 = int_to_ptr.vmem [resolvable:$true] %s17
      %20 = dma.hbm_to_vmem [thread:$0]  %s16, 128, %s18, [#allocation4]
    $region5: #{tpu_custom_call.1} parent=1 // pred_fallthru
      _
    // Predicated region
    $region6: #{tpu_custom_call.1} parent=1 // pred_check
      _
    $region7: #{tpu_custom_call.1} parent=1 // pred_check_branch
      %22 = sbr.rel (0) target = $region9
    $region8: #{tpu_custom_call.1} parent=1 // pred_region
      %24 = vsyncadd [#allocation7], 0
      %s25 = sshll.u32 %s1, 4
      %s26 = int_to_ptr.hbm [resolvable:$true] %s25
      %s27 = sshll.u32 [#allocation6], 4
      %s28 = int_to_ptr.vmem [resolvable:$true] %s27
      %33 = dma.hbm_to_vmem [thread:$0]  %s26, 2048, %s28, [#allocation7], 128, 128, 8
    $region9: #{tpu_custom_call.1} parent=1 // pred_fallthru
      _
    // Predicated region
    $region10: #{tpu_custom_call.1} parent=1 // pred_check
      _
    $region11: #{tpu_custom_call.1} parent=1 // pred_check_branch
      %35 = sbr.rel (0) target = $region13
    $region12: #{tpu_custom_call.1} parent=1 // pred_region
      %37 = dma.done [#allocation4], 128
    $region13: #{tpu_custom_call.1} parent=1 // pred_fallthru
      _
    // Predicated region
    $region14: #{tpu_custom_call.1} parent=1 // pred_check
      _
    $region15: #{tpu_custom_call.1} parent=1 // pred_check_branch
      %39 = sbr.rel (0) target = $region17
    $region16: #{tpu_custom_call.1} parent=1 // pred_region
      %41 = dma.done [#allocation7], 2048
    $region17: #{tpu_custom_call.1} parent=1 // pred_fallthru
      _
    %p42 = scmp.eq.s32.totalorder 0, 0
    // Predicated region
    $region18: #{tpu_custom_call.1} parent=1 // pred_check
      %p43 = pneg %p42
    $region19: #{tpu_custom_call.1} parent=1 // pred_check_branch
      %45 = sbr.rel (%p43) target = $region21
    $region20: #{tpu_custom_call.1} parent=1 // pred_region
      %46 = vst [vmem:[#allocation2] sm:$0xff] 0.0
    $region21: #{tpu_custom_call.1} parent=1 // pred_fallthru
      _
    %v47 = vld [vmem:[#allocation2] sm:$0xff]
    %v48 = vld [vmem:[#allocation3] sm:$0xff]
    %v49 = vld [vmem:[#allocation6] sm:$0xff]
    %v50 = vld [vmem:[#allocation6 + $0x8] sm:$0xff]
    %v51 = vld [vmem:[#allocation6 + $0x10] sm:$0xff]
    %v52 = vld [vmem:[#allocation6 + $0x18] sm:$0xff]
    %v53 = vld [vmem:[#allocation6 + $0x20] sm:$0xff]
    %v54 = vld [vmem:[#allocation6 + $0x28] sm:$0xff]
    %v55 = vld [vmem:[#allocation6 + $0x30] sm:$0xff]
    %v56 = vld [vmem:[#allocation6 + $0x38] sm:$0xff]
    %v57 = vld [vmem:[#allocation6 + $0x40] sm:$0xff]
    %v58 = vld [vmem:[#allocation6 + $0x48] sm:$0xff]
    %v59 = vld [vmem:[#allocation6 + $0x50] sm:$0xff]
    %v60 = vld [vmem:[#allocation6 + $0x58] sm:$0xff]
    %v61 = vld [vmem:[#allocation6 + $0x60] sm:$0xff]
    %v62 = vld [vmem:[#allocation6 + $0x68] sm:$0xff]
    %v63 = vld [vmem:[#allocation6 + $0x70] sm:$0xff]
    %v64 = vld [vmem:[#allocation6 + $0x78] sm:$0xff]
    %65 = vmatpush.msra.mxu0 %v64
    %66 = vmatpush.msra.mxu0 %v63
    %67 = vmatpush.msra.mxu0 %v62
    %68 = vmatpush.msra.mxu0 %v61
    %69 = vmatpush.msra.mxu0 %v60
    %70 = vmatpush.msra.mxu0 %v59
    %71 = vmatpush.msra.mxu0 %v58
    %72 = vmatpush.msra.mxu0 %v57
    %73 = vmatpush.msra.mxu0 %v56
    %74 = vmatpush.msra.mxu0 %v55
    %75 = vmatpush.msra.mxu0 %v54
    %76 = vmatpush.msra.mxu0 %v53
    %77 = vmatpush.msra.mxu0 %v52
    %78 = vmatpush.msra.mxu0 %v51
    %79 = vmatpush.msra.mxu0 %v50
    %80 = vmatpush.msra.mxu0 %v49
    %81 = vmatmul.f32.gmra.mxu0 %v48
    %v82 = vpop.f32.mrf.mxu0
    %v83 = vadd.f32 0.0, %v82
    %84 = vdwg.mxu0
    %v85 = vadd.f32 %v47, %v83
    %86 = vst [vmem:[#allocation2] sm:$0xff] %v85
    // Predicated region
    $region22: #{tpu_custom_call.1} parent=1 // pred_check
      %p87 = pneg %p42
    $region23: #{tpu_custom_call.1} parent=1 // pred_check_branch
      %89 = sbr.rel (%p87) target = $region25
    $region24: #{tpu_custom_call.1} parent=1 // pred_region
      %v90 = vld [vmem:[#allocation2] sm:$0xff]
      %v91 = vmul.f32 %v90, 0.25
      %92 = vst [vmem:[#allocation8] sm:$0xff] %v91
    $region25: #{tpu_custom_call.1} parent=1 // pred_fallthru
      _
    // Predicated region
    $region26: #{tpu_custom_call.1} parent=1 // pred_check
      _
    $region27: #{tpu_custom_call.1} parent=1 // pred_check_branch
      %94 = sbr.rel (0) target = $region29
    $region28: #{tpu_custom_call.1} parent=1 // pred_region
      %96 = vsyncadd [#allocation5], 0
      %s98 = sshll.u32 [#allocation8], 4
      %s99 = int_to_ptr.vmem [resolvable:$true] %s98
      %s100 = sshll.u32 %s2, 4
      %s101 = int_to_ptr.hbm [resolvable:$true] %s100
      %103 = dma.vmem_to_hbm [thread:$0]  %s99, 128, %s101, [#allocation5]
    $region29: #{tpu_custom_call.1} parent=1 // pred_fallthru
      _
    // Predicated region
    $region30: #{tpu_custom_call.1} parent=1 // pred_check
      _
    $region31: #{tpu_custom_call.1} parent=1 // pred_check_branch
      %105 = sbr.rel (0) target = $region33
    $region32: #{tpu_custom_call.1} parent=1 // pred_region
      %107 = dma.done [#allocation5], 128
    $region33: #{tpu_custom_call.1} parent=1 // pred_fallthru
      _
    %108 = vsyncpa [#allocation4], 1
    %109 = vsyncpa [#allocation7], 1
    %110 = vsyncpa [#allocation5], 1

</llo_original>
